<compile_context>
chip_gen: v7x
topology: tpu7x:2x2x1
jax: 0.10.0
libtpu: 0.0.40
codegen_flags: <defaults>
</compile_context>

<pallas_src>
import functools

import jax
import jax.numpy as jnp
import numpy as np
from jax.experimental import pallas as pl
from jax.experimental.pallas import tpu as pltpu


# ----------------------------------------------------------------------------
# Pallas kernel: streamed time-sum (MXU) + fused classifier/aux + selector head
# ----------------------------------------------------------------------------
def _selective_head_kernel(
    x_ref,            # (Bt, Tt, D)   activation tile (bf16/f32 stream dtype)
    wcat_ref,         # (D, 2C)       fused classifier + aux weights (f32)
    bcat_ref,         # (1, 2C)
    w1_ref,           # (D, D)        selector fc1
    b1_ref,           # (1, D)
    w2_ref,           # (1, D)        selector fc2 row, BatchNorm folded in
    b2_ref,           # (1, 1)        folded fc2 bias
    pa_ref,           # (Bt, 2C)      out: [classifier | aux]
    sel_ref,          # (Bt, 1)       out: selector
    acc_ref,          # (Bt, D) f32   scratch: running time-sum
    *, inv_seq_len, seq_len, t_tile, needs_mask,
):
    t = pl.program_id(1)
    nt = pl.num_programs(1)

    @pl.when(t == 0)
    def _init():
        acc_ref[...] = jnp.zeros_like(acc_ref)

    def accumulate(x):
        # Time reduction as a bf16 batched matmul against a ones row: the MXU is
        # idle during the mem-bound streaming phase, and this avoids a full-tile
        # bf16->f32 cast plus an XLU sublane reduce on the hot loop.
        ones = jnp.ones((x.shape[0], 1, x.shape[1]), dtype=x.dtype)
        red = jnp.einsum("bst,btd->bsd", ones, x,
                         preferred_element_type=jnp.float32)
        acc_ref[...] += red[:, 0, :]

    if needs_mask:
        # Only the final (ragged) time tile pays for masking.
        @pl.when(t < nt - 1)
        def _fast():
            accumulate(x_ref[...])

        @pl.when(t == nt - 1)
        def _ragged():
            x = x_ref[...]
            tidx = jax.lax.broadcasted_iota(jnp.int32, x.shape, 1) + t * t_tile
            accumulate(jnp.where(tidx < seq_len, x, jnp.zeros_like(x)))
    else:
        accumulate(x_ref[...])

    @pl.when(t == nt - 1)
    def _finalize():
        feat = acc_ref[...] * inv_seq_len                        # true-T mean, f32

        # fused classifier + aux classifier: one MXU pass, lane-denser output
        pa = jnp.dot(feat, wcat_ref[...],
                     preferred_element_type=jnp.float32) + bcat_ref[...]

        # selector: Linear -> ReLU -> (BN folded into w2/b2) -> dot(row) -> Sigmoid
        h = jnp.dot(feat, w1_ref[...],
                    preferred_element_type=jnp.float32) + b1_ref[...]
        h = jnp.maximum(h, 0.0)
        s = jnp.sum(h * w2_ref[...], axis=-1, keepdims=True) + b2_ref[...]

        pa_ref[...] = pa.astype(pa_ref.dtype)
        sel_ref[...] = jax.nn.sigmoid(s).astype(sel_ref.dtype)


# ----------------------------------------------------------------------------
# Wrapper
# ----------------------------------------------------------------------------
def fold_head_params(params, eps=1e-5):
    """One-time weight prep: concat classifier+aux, fold eval-mode BN into fc2."""
    f32 = jnp.float32
    wcat = jnp.concatenate([params["wc"], params["wa"]], axis=1).astype(f32)   # (D, 2C)
    bcat = jnp.concatenate([params["bc"], params["ba"]], axis=1).astype(f32)   # (1, 2C)
    scale = params["gamma"] / jnp.sqrt(params["rvar"] + eps)                   # (1, D)
    w2row = (params["w2"].T * scale).astype(f32)                               # (1, D)
    b2 = (params["b2"]
          + (params["beta"] - params["rmean"] * scale) @ params["w2"]).astype(f32)
    return {
        "wcat": wcat, "bcat": bcat,
        "w1": params["w1"].astype(f32), "b1": params["b1"].astype(f32),
        "w2row": w2row, "b2": b2,
    }


def selective_net_heads(last_hidden_state, folded, *, b_tile=None, t_tile=None):
    """Mean-pool over time + classifier/selector/aux heads in one Pallas call."""
    B, T, D = last_hidden_state.shape
    C2 = folded["wcat"].shape[1]

    # --- batch tiling: keep nb >= 2 when possible (each tile a multiple of 8) so
    # the "parallel" batch axis can be split across TensorCores on v7x; otherwise
    # take the whole batch (single-TC chips: fewer grid steps, bigger matmul M).
    if b_tile is None:
        b_tile = B // 2 if (B % 16 == 0) else B
    b_tile = min(b_tile, B)
    if B % b_tile != 0 or (b_tile != B and b_tile % 8 != 0):
        b_tile = B
    nb = B // b_tile

    # --- time tiling: big tiles so the HBM-bound stream approaches roofline.
    if t_tile is None:
        t_tile = min(256, T)
    t_tile = min(t_tile, T)
    if t_tile != T and t_tile % 8 != 0:
        t_tile = T
    nt = pl.cdiv(T, t_tile)
    needs_mask = (T % t_tile) != 0

    def resident(shape):
        # weights / biases: constant block index -> DMA'd once, stay in VMEM
        return pl.BlockSpec(shape, lambda b, t: (0, 0))

    in_specs = [
        pl.BlockSpec((b_tile, t_tile, D), lambda b, t: (b, t, 0)),   # activation stream
        resident((D, C2)), resident((1, C2)),
        resident((D, D)), resident((1, D)),
        resident((1, D)), resident((1, 1)),
    ]
    out_specs = (
        pl.BlockSpec((b_tile, C2), lambda b, t: (b, 0)),   # written only at t == last
        pl.BlockSpec((b_tile, 1), lambda b, t: (b, 0)),
    )
    out_shape = (
        jax.ShapeDtypeStruct((B, C2), jnp.float32),
        jax.ShapeDtypeStruct((B, 1), jnp.float32),
    )

    # VMEM budget: double-buffered activation stream + resident weights + scratch.
    itemsize = last_hidden_state.dtype.itemsize
    stream_bytes = 2 * b_tile * t_tile * D * itemsize
    resident_bytes = 4 * (D * C2 + C2 + D * D + 3 * D + 1)
    io_bytes = 2 * 4 * (b_tile * C2 + b_tile)
    scratch_bytes = 4 * b_tile * D
    need = stream_bytes + resident_bytes + io_bytes + scratch_bytes
    vmem_limit = int(min(96 * 2**20, max(32 * 2**20, 2 * need)))

    x_bytes = last_hidden_state.size * itemsize
    cost = pl.CostEstimate(
        flops=int(2 * B * T * D + 2 * B * D * (D + C2) + 4 * B * D),
        transcendentals=int(B),
        bytes_accessed=int(x_bytes + resident_bytes + 4 * B * (C2 + 1)),
    )

    kernel = functools.partial(
        _selective_head_kernel,
        inv_seq_len=1.0 / T, seq_len=T, t_tile=t_tile, needs_mask=needs_mask)

    pa, sel = pl.pallas_call(
        kernel,
        grid_spec=pltpu.PrefetchScalarGridSpec(
            num_scalar_prefetch=0,
            grid=(nb, nt),
            in_specs=in_specs,
            out_specs=out_specs,
            scratch_shapes=[pltpu.VMEM((b_tile, D), jnp.float32)],
        ),
        out_shape=out_shape,
        compiler_params=pltpu.CompilerParams(
            dimension_semantics=("parallel", "arbitrary"),
            vmem_limit_bytes=vmem_limit,
        ),
        cost_estimate=cost,
    )(
        last_hidden_state,
        folded["wcat"], folded["bcat"],
        folded["w1"], folded["b1"],
        folded["w2row"], folded["b2"],
    )

    C = C2 // 2
    return pa[:, :C], sel, pa[:, C:]


# ----------------------------------------------------------------------------
# Parameter init (deterministic, mirrors _initialize_weights; eval-mode BN)
# ----------------------------------------------------------------------------
def init_params(key, feature_size, num_classes):
    D, C = feature_size, num_classes
    k = jax.random.split(key, 4)
    # torch Linear: y = x @ W.T + b, W ~ N(0, 0.01), b = 0. Stored as (in, out).
    return {
        "wc": (0.01 * jax.random.normal(k[0], (D, C))).astype(jnp.float32),
        "bc": jnp.zeros((1, C), jnp.float32),
        "w1": (0.01 * jax.random.normal(k[1], (D, D))).astype(jnp.float32),
        "b1": jnp.zeros((1, D), jnp.float32),
        # BatchNorm1d: weight=1, bias=0, running mean=0, var=1 (eval mode)
        "gamma": jnp.ones((1, D), jnp.float32),
        "beta": jnp.zeros((1, D), jnp.float32),
        "rmean": jnp.zeros((1, D), jnp.float32),
        "rvar": jnp.ones((1, D), jnp.float32),
        "w2": (0.01 * jax.random.normal(k[2], (D, 1))).astype(jnp.float32),
        "b2": jnp.zeros((1, 1), jnp.float32),
        "wa": (0.01 * jax.random.normal(k[3], (D, C))).astype(jnp.float32),
        "ba": jnp.zeros((1, C), jnp.float32),
    }


# ----------------------------------------------------------------------------
# Stub HuBERT backbone (plain JAX glue): raw waveform -> (B, T, D) features
# ----------------------------------------------------------------------------
def stub_hubert(input_values, w_feat, frame_len):
    B, S = input_values.shape
    T = S // frame_len
    frames = input_values[:, : T * frame_len].reshape(B, T, frame_len)
    return jnp.tanh(frames @ w_feat)  # (B, T, D)


# ----------------------------------------------------------------------------
# Reference (pure jnp, unfused params) for verification
# ----------------------------------------------------------------------------
def reference_heads(x, p, eps=1e-5):
    x = x.astype(jnp.float32)
    feat = jnp.mean(x, axis=1)
    pred = feat @ p["wc"] + p["bc"]
    h = jnp.maximum(feat @ p["w1"] + p["b1"], 0.0)
    h = (h - p["rmean"]) / jnp.sqrt(p["rvar"] + eps) * p["gamma"] + p["beta"]
    sel = jax.nn.sigmoid(h @ p["w2"] + p["b2"])
    aux = feat @ p["wa"] + p["ba"]
    return pred, sel, aux


if __name__ == "__main__":
    key = jax.random.PRNGKey(0)
    B, T, D, C = 16, 40, 32, 5         # batch, seq frames, feature_size, num_classes
    FRAME_LEN = 64                     # stub backbone frame length
    S = T * FRAME_LEN                  # raw waveform samples

    k_in, k_feat, k_params = jax.random.split(key, 3)
    input_values = jax.random.normal(k_in, (B, S), dtype=jnp.float32)
    w_feat = (0.05 * jax.random.normal(k_feat, (FRAME_LEN, D))).astype(jnp.float32)
    params = init_params(k_params, D, C)
    folded = fold_head_params(params)

    # "hubert_model(input_values).last_hidden_state" (stub, plain JAX glue).
    # Activation streamed to the kernel in bf16 (mem-bound read); accumulate in f32.
    last_hidden_state = stub_hubert(input_values, w_feat, FRAME_LEN).astype(jnp.bfloat16)
    pred_ref, sel_ref, aux_ref = reference_heads(last_hidden_state, params)

    # default tiling (single full-T tile at this toy T; 256-frame tiles for real T)
    pred, sel, aux = selective_net_heads(last_hidden_state, folded)
    jax.block_until_ready((pred, sel, aux))
    assert pred.shape == (B, C) and sel.shape == (B, 1) and aux.shape == (B, C)
    for got, want in ((pred, pred_ref), (sel, sel_ref), (aux, aux_ref)):
        np.testing.assert_allclose(np.asarray(got), np.asarray(want), atol=1e-4, rtol=1e-4)

    # force multi-tile ragged time streaming to exercise the masked last-tile path
    pred2, sel2, aux2 = selective_net_heads(last_hidden_state, folded, t_tile=16)
    jax.block_until_ready((pred2, sel2, aux2))
    for got, want in ((pred2, pred_ref), (sel2, sel_ref), (aux2, aux_ref)):
        np.testing.assert_allclose(np.asarray(got), np.asarray(want), atol=1e-4, rtol=1e-4)

    print("KERNEL_OK")
</pallas_src>

<mosaic_0001>
module attributes {stable_mosaic.version = 11 : i64} {
  func.func @_selective_head_kernel(%arg0: i32, %arg1: i32, %arg2: memref<8x40x32xbf16, #tpu.memory_space<vmem>>, %arg3: memref<32x10xf32, #tpu.memory_space<vmem>>, %arg4: memref<1x10xf32, #tpu.memory_space<vmem>>, %arg5: memref<32x32xf32, #tpu.memory_space<vmem>>, %arg6: memref<1x32xf32, #tpu.memory_space<vmem>>, %arg7: memref<1x32xf32, #tpu.memory_space<vmem>>, %arg8: memref<1x1xf32, #tpu.memory_space<vmem>>, %arg9: memref<8x10xf32, #tpu.memory_space<vmem>>, %arg10: memref<8x1xf32, #tpu.memory_space<vmem>>, %arg11: memref<8x32xf32, #tpu.memory_space<vmem>>) attributes {dimension_semantics = [#tpu.dimension_semantics<parallel>, #tpu.dimension_semantics<arbitrary>], iteration_bounds = array<i64: 2, 1>, scalar_prefetch = 0 : i64, scratch_operands = 1 : i64, tpu.core_type = #tpu.core_type<tc>, window_params = [{transform_indices = @transform_0, window_bounds = array<i64: 8, 40, 32>}, {pipeline_mode = #tpu.pipeline_mode<synchronous>, transform_indices = @transform_1, window_bounds = array<i64: 32, 10>}, {pipeline_mode = #tpu.pipeline_mode<synchronous>, transform_indices = @transform_2, window_bounds = array<i64: 1, 10>}, {pipeline_mode = #tpu.pipeline_mode<synchronous>, transform_indices = @transform_3, window_bounds = array<i64: 32, 32>}, {pipeline_mode = #tpu.pipeline_mode<synchronous>, transform_indices = @transform_4, window_bounds = array<i64: 1, 32>}, {pipeline_mode = #tpu.pipeline_mode<synchronous>, transform_indices = @transform_5, window_bounds = array<i64: 1, 32>}, {pipeline_mode = #tpu.pipeline_mode<synchronous>, transform_indices = @transform_6, window_bounds = array<i64: 1, 1>}, {transform_indices = @transform_7, window_bounds = array<i64: 8, 10>}, {transform_indices = @transform_8, window_bounds = array<i64: 8, 1>}]} {
    %c0_i32 = arith.constant 0 : i32
    %0 = arith.cmpi eq, %arg1, %c0_i32 : i32
    %1 = arith.extui %0 : i1 to i32
    %c0_i32_0 = arith.constant 0 : i32
    %2 = arith.cmpi ne, %1, %c0_i32_0 : i32
    scf.if %2 {
      %cst_10 = arith.constant 0.000000e+00 : f32
      %13 = vector.broadcast %cst_10 : f32 to vector<8x32xf32>
      %c0_11 = arith.constant 0 : index
      %c0_12 = arith.constant 0 : index
      %14 = vector.load %arg11[%c0_11, %c0_12] : memref<8x32xf32, #tpu.memory_space<vmem>>, vector<8x32xf32>
      tpu.vector_store %arg11[%c0_11, %c0_12], %13 {strides = array<i32>} : memref<8x32xf32, #tpu.memory_space<vmem>>, vector<8x32xf32>,
    } else {
    }
    %c0 = arith.constant 0 : index
    %c0_1 = arith.constant 0 : index
    %c0_2 = arith.constant 0 : index
    %3 = vector.load %arg2[%c0, %c0_1, %c0_2] : memref<8x40x32xbf16, #tpu.memory_space<vmem>>, vector<8x40x32xbf16>
    %cst = arith.constant 1.000000e+00 : bf16
    %4 = vector.broadcast %cst : bf16 to vector<8x1x40xbf16>
    "tpu.trace_start"() <{level = 10 : i32, message = "bst,btd->bsd"}> : () -> ()
    %cst_3 = arith.constant dense<0.000000e+00> : vector<8x1x32xf32>
    %5 = tpu.matmul %4, %3, %cst_3 {dimension_numbers = #tpu.dot_dimension_numbers<[2], [1], [1], [2], [0, 0, 0, 1, 1, 2], [0], [0]>} : vector<8x1x40xbf16>, vector<8x40x32xbf16>, vector<8x1x32xf32> -> vector<8x1x32xf32>
    "tpu.trace_stop"() : () -> ()
    %c0_4 = arith.constant 0 : index
    %c0_5 = arith.constant 0 : index
    %6 = vector.load %arg11[%c0_4, %c0_5] : memref<8x32xf32, #tpu.memory_space<vmem>>, vector<8x32xf32>
    %7 = vector.shape_cast %5 : vector<8x1x32xf32> to vector<8x32xf32>
    %8 = arith.addf %6, %7 : vector<8x32xf32>
    %c0_6 = arith.constant 0 : index
    %c0_7 = arith.constant 0 : index
    %9 = vector.load %arg11[%c0_6, %c0_7] : memref<8x32xf32, #tpu.memory_space<vmem>>, vector<8x32xf32>
    tpu.vector_store %arg11[%c0_6, %c0_7], %8 {strides = array<i32>} : memref<8x32xf32, #tpu.memory_space<vmem>>, vector<8x32xf32>,
    %c0_i32_8 = arith.constant 0 : i32
    %10 = arith.cmpi eq, %arg1, %c0_i32_8 : i32
    %11 = arith.extui %10 : i1 to i32
    %c0_i32_9 = arith.constant 0 : i32
    %12 = arith.cmpi ne, %11, %c0_i32_9 : i32
    scf.if %12 {
      %c0_10 = arith.constant 0 : index
      %c0_11 = arith.constant 0 : index
      %13 = vector.load %arg11[%c0_10, %c0_11] : memref<8x32xf32, #tpu.memory_space<vmem>>, vector<8x32xf32>
      %cst_12 = arith.constant 2.500000e-02 : f32
      %14 = vector.broadcast %cst_12 : f32 to vector<8x32xf32>
      %15 = arith.mulf %13, %14 : vector<8x32xf32>
      %c0_13 = arith.constant 0 : index
      %c0_14 = arith.constant 0 : index
      %16 = vector.load %arg3[%c0_13, %c0_14] : memref<32x10xf32, #tpu.memory_space<vmem>>, vector<32x10xf32>
      %cst_15 = arith.constant dense<0.000000e+00> : vector<8x10xf32>
      %17 = tpu.matmul %15, %16, %cst_15 {dimension_numbers = #tpu.dot_dimension_numbers<[1], [0], [0], [1], [0, 0, 1, 1], [], []>} : vector<8x32xf32>, vector<32x10xf32>, vector<8x10xf32> -> vector<8x10xf32>
      %c0_16 = arith.constant 0 : index
      %c0_17 = arith.constant 0 : index
      %18 = vector.load %arg4[%c0_16, %c0_17] : memref<1x10xf32, #tpu.memory_space<vmem>>, vector<1x10xf32>
      %19 = vector.broadcast %18 : vector<1x10xf32> to vector<8x10xf32>
      %20 = arith.addf %17, %19 : vector<8x10xf32>
      %c0_18 = arith.constant 0 : index
      %c0_19 = arith.constant 0 : index
      %21 = vector.load %arg5[%c0_18, %c0_19] : memref<32x32xf32, #tpu.memory_space<vmem>>, vector<32x32xf32>
      %cst_20 = arith.constant dense<0.000000e+00> : vector<8x32xf32>
      %22 = tpu.matmul %15, %21, %cst_20 {dimension_numbers = #tpu.dot_dimension_numbers<[1], [0], [0], [1], [0, 0, 1, 1], [], []>} : vector<8x32xf32>, vector<32x32xf32>, vector<8x32xf32> -> vector<8x32xf32>
      %c0_21 = arith.constant 0 : index
      %c0_22 = arith.constant 0 : index
      %23 = vector.load %arg6[%c0_21, %c0_22] : memref<1x32xf32, #tpu.memory_space<vmem>>, vector<1x32xf32>
      %24 = vector.broadcast %23 : vector<1x32xf32> to vector<8x32xf32>
      %25 = arith.addf %22, %24 : vector<8x32xf32>
      %cst_23 = arith.constant 0.000000e+00 : f32
      %26 = vector.broadcast %cst_23 : f32 to vector<8x32xf32>
      %27 = arith.maximumf %25, %26 : vector<8x32xf32>
      %c0_24 = arith.constant 0 : index
      %c0_25 = arith.constant 0 : index
      %28 = vector.load %arg7[%c0_24, %c0_25] : memref<1x32xf32, #tpu.memory_space<vmem>>, vector<1x32xf32>
      %29 = vector.broadcast %28 : vector<1x32xf32> to vector<8x32xf32>
      %30 = arith.mulf %27, %29 : vector<8x32xf32>
      %cst_26 = arith.constant dense<0.000000e+00> : vector<8xf32>
      %31 = vector.multi_reduction <add>, %30, %cst_26 [1] : vector<8x32xf32> to vector<8xf32>
      %32 = vector.shape_cast %31 : vector<8xf32> to vector<8x1xf32>
      %c0_27 = arith.constant 0 : index
      %c0_28 = arith.constant 0 : index
      %33 = vector.load %arg8[%c0_27, %c0_28] : memref<1x1xf32, #tpu.memory_space<vmem>>, vector<1x1xf32>
      %34 = vector.broadcast %33 : vector<1x1xf32> to vector<8x1xf32>
      %35 = arith.addf %32, %34 : vector<8x1xf32>
      %c0_29 = arith.constant 0 : index
      %c0_30 = arith.constant 0 : index
      %36 = vector.load %arg9[%c0_29, %c0_30] : memref<8x10xf32, #tpu.memory_space<vmem>>, vector<8x10xf32>
      tpu.vector_store %arg9[%c0_29, %c0_30], %20 {strides = array<i32>} : memref<8x10xf32, #tpu.memory_space<vmem>>, vector<8x10xf32>,
      %37 = arith.negf %35 : vector<8x1xf32>
      %38 = math.exp %37 : vector<8x1xf32>
      %cst_31 = arith.constant 1.000000e+00 : f32
      %39 = vector.broadcast %cst_31 : f32 to vector<8x1xf32>
      %40 = arith.addf %39, %38 : vector<8x1xf32>
      %41 = arith.divf %39, %40 : vector<8x1xf32>
      %c0_32 = arith.constant 0 : index
      %c0_33 = arith.constant 0 : index
      %42 = vector.load %arg10[%c0_32, %c0_33] : memref<8x1xf32, #tpu.memory_space<vmem>>, vector<8x1xf32>
      tpu.vector_store %arg10[%c0_32, %c0_33], %41 {strides = array<i32>} : memref<8x1xf32, #tpu.memory_space<vmem>>, vector<8x1xf32>,
    } else {
    }
    return
  }
  func.func @transform_0(%arg0: i32, %arg1: i32) -> (i32, i32, i32) {
    %c0_i32 = arith.constant 0 : i32
    %c0_i32_0 = arith.constant 0 : i32
    return %arg0, %arg1, %c0_i32 : i32, i32, i32
  }
  func.func @transform_1(%arg0: i32, %arg1: i32) -> (i32, i32) {
    %c0_i32 = arith.constant 0 : i32
    %c0_i32_0 = arith.constant 0 : i32
    %c0_i32_1 = arith.constant 0 : i32
    return %c0_i32, %c0_i32_0 : i32, i32
  }
  func.func @transform_2(%arg0: i32, %arg1: i32) -> (i32, i32) {
    %c0_i32 = arith.constant 0 : i32
    %c0_i32_0 = arith.constant 0 : i32
    %c0_i32_1 = arith.constant 0 : i32
    return %c0_i32, %c0_i32_0 : i32, i32
  }
  func.func @transform_3(%arg0: i32, %arg1: i32) -> (i32, i32) {
    %c0_i32 = arith.constant 0 : i32
    %c0_i32_0 = arith.constant 0 : i32
    %c0_i32_1 = arith.constant 0 : i32
    return %c0_i32, %c0_i32_0 : i32, i32
  }
  func.func @transform_4(%arg0: i32, %arg1: i32) -> (i32, i32) {
    %c0_i32 = arith.constant 0 : i32
    %c0_i32_0 = arith.constant 0 : i32
    %c0_i32_1 = arith.constant 0 : i32
    return %c0_i32, %c0_i32_0 : i32, i32
  }
  func.func @transform_5(%arg0: i32, %arg1: i32) -> (i32, i32) {
    %c0_i32 = arith.constant 0 : i32
    %c0_i32_0 = arith.constant 0 : i32
    %c0_i32_1 = arith.constant 0 : i32
    return %c0_i32, %c0_i32_0 : i32, i32
  }
  func.func @transform_6(%arg0: i32, %arg1: i32) -> (i32, i32) {
    %c0_i32 = arith.constant 0 : i32
    %c0_i32_0 = arith.constant 0 : i32
    %c0_i32_1 = arith.constant 0 : i32
    return %c0_i32, %c0_i32_0 : i32, i32
  }
  func.func @transform_7(%arg0: i32, %arg1: i32) -> (i32, i32) {
    %c0_i32 = arith.constant 0 : i32
    %c0_i32_0 = arith.constant 0 : i32
    return %arg0, %c0_i32 : i32, i32
  }
  func.func @transform_8(%arg0: i32, %arg1: i32) -> (i32, i32) {
    %c0_i32 = arith.constant 0 : i32
    %c0_i32_0 = arith.constant 0 : i32
    return %arg0, %c0_i32 : i32, i32
  }
}

</mosaic_0001>

<llo_original>
// kernel: tpu_custom_call.1
$region0: #{tpu_custom_call.1}
  #allocation0 [shape = 'u32[]', space=smem, size = 0x4, offset = 0x4, fixed_abs, tag = 'smem constant byte address 0x4 - core index']
  #allocation1 [shape = 'u32[144,128]{1,0:T(1,128)}', space=vmem, size = 0x12000, scoped, tag = 'internal scratch']
  #allocation2 [shape = 'f32[8,32]{1,0:T(8,128)}', space=vmem, size = 0x1000, scoped, tag = 'scratch operand']
  #allocation3 [shape = 'f32[1,1]{1,0:T(1,128)S(1)}', space=vmem, size = 0x200, scoped, tag = 'scoped memory for tpu_custom_call.1']
  %s0 = inlined_call_operand.vmem [shape: bf16[16,40,32], index: 0, kind: input, shape index: {}]
  %s1 = inlined_call_operand.vmem [shape: f32[32,10], index: 1, kind: input, shape index: {}]
  %s2 = inlined_call_operand.vmem [shape: f32[1,10], index: 2, kind: input, shape index: {}]
  %s3 = inlined_call_operand.vmem [shape: f32[32,32], index: 3, kind: input, shape index: {}]
  %s4 = inlined_call_operand.vmem [shape: f32[1,32], index: 4, kind: input, shape index: {}]
  %s5 = inlined_call_operand.vmem [shape: f32[1,32], index: 5, kind: input, shape index: {}]
  %s6 = inlined_call_operand.<no memory space> [shape: f32[1,1], index: 6, kind: input, shape index: {}]
  %s7 = inlined_call_operand.hbm [shape: f32[16,10], index: 7, kind: output, shape index: {0}]
  %s8 = inlined_call_operand.vmem [shape: f32[16,1], index: 8, kind: output, shape index: {1}]
  %9 = xla_tuple %s7, %s8
  %s10 = sld [smem:[#allocation0]]
  $region77: #{tpu_custom_call.1} parent=0
    _
  %s12 = ssub.s32 1, %s10
  %s13 = scalar_select 0, %s12, %s10
  %v14 = vstv %s6
  %15 = vst [vmem:[#allocation3] sm:$0x1] %v14
  $region1: #{tpu_custom_call.1} parent=0
    #allocation4 [shape = 'u8[8192]{0}', space=vmem, size = 0x2000, scoped, tag = 'output window, operand 0']
    #allocation5 [shape = 's32[2]{0}', space=sflag, size = 0x8, scoped, tag = 'scoped memory for tpu_custom_call.1']
    %16 = vsyncpa [#allocation5], 0
    %s17 = scalar_lea.sflag [#allocation5], 1
    %18 = vsyncpa %s17, 0
    loop: start=0, step=1, limit=4
    $region2: #{tpu_custom_call.1} parent=1 // loop_pre_header
      _
    $region3: #{tpu_custom_call.1} parent=1 // loop_header
      %s20 = sphi 0, %s24
      %p21 = scmp.ge.s32.totalorder %s20, 4
      %s27 = sphi 0, %s39
      %s28 = sphi 0, %s35
      %s29 = sphi 0, %s27
      %s30 = sphi 0, %s28
      %s31 = sphi 0, %s29
      %s32 = sphi 0, %s30
      %s44 = sphi 0, %s46
      %s47 = sphi 0, %s44
      %s48 = sphi 0, %s47
      %s64 = sphi 0, %s48
      %s68 = sphi 0, %s68
      %s70 = sphi 0, %s68
      %s71 = sphi 0, %s70
      %s85 = sphi 0, %s71
      %s89 = sphi 0, %s89
      %s91 = sphi 0, %s89
      %s92 = sphi 0, %s91
      %s106 = sphi 0, %s92
      %s110 = sphi 0, %s110
      %s112 = sphi 0, %s110
      %s113 = sphi 0, %s112
      %s127 = sphi 0, %s113
      %s131 = sphi 0, %s131
      %s133 = sphi 0, %s131
      %s134 = sphi 0, %s133
      %s148 = sphi 0, %s134
      %s152 = sphi 0, %s152
      %s154 = sphi 0, %s152
      %s155 = sphi 0, %s154
      %s169 = sphi 0, %s155
      %s173 = sphi 0, %s173
      %s175 = sphi 0, %s173
      %s176 = sphi 0, %s175
      %s190 = sphi 0, %s176
      %s196 = sphi 0, %s198
      %s199 = sphi 0, %s196
      %s200 = sphi 0, %s199
      %s216 = sphi 0, %s200
      %s222 = sphi 0, %s224
      %s225 = sphi 0, %s222
      %s226 = sphi 0, %s225
      %s242 = sphi 0, %s226
    $region4: #{tpu_custom_call.1} parent=1 // loop_header_branch
      %23 = sbr.rel (%p21) target = $region8
    $region5: #{tpu_custom_call.1} parent=1 // loop_body
      %s25 = ssub.s32 %s20, 1
      %s26 = ssub.s32 %s20, 2
      %s33 = sadd.s32 1, %s28
      %p34 = scmp.ge.s32.totalorder %s33, 1
      %s35 = scalar_select %p34, 0, %s33
      %s36 = sadd.s32 1, %s27
      %s37 = scalar_select %p34, %s36, %s27
      %p38 = scmp.ge.s32.totalorder %s37, 2
      %s39 = scalar_select %p38, 0, %s37
      %s40 = ssub.s32 %s27, %s39
      %s41 = ssub.s32 %s28, %s35
      %s42 = sor.u32 %s40, %s41
      %p43 = scmp.eq.s32.totalorder %s42, 0
      %s45 = sadd.s32 %s44, 1
      %s46 = scalar_select %p43, %s44, %s45
      %p49 = pneg %p43
      %p50 = scmp.eq.s32.totalorder %s20, 1
      %p51 = por %p49, %p50
      %p52 = scmp.ne.s32.totalorder %s44, %s47
      %p53 = scmp.eq.s32.totalorder %s20, 0
      %p54 = por %p52, %p53
      %p55 = scmp.ne.s32.totalorder %s44, %s47
      %p56 = scmp.eq.s32.totalorder %s25, 1
      %p57 = por %p55, %p56
      %p58 = scmp.ne.s32.totalorder %s47, %s48
      %p59 = scmp.eq.s32.totalorder %s25, 0
      %p60 = por %p58, %p59
      %p61 = scmp.ne.s32.totalorder %s47, %s48
      %p62 = scmp.eq.s32.totalorder %s26, 1
      %p63 = por %p61, %p62
      %p65 = scmp.ne.s32.totalorder %s48, %s64
      %p66 = scmp.eq.s32.totalorder %s26, 0
      %p67 = por %p65, %p66
      %s69 = sadd.s32 %s68, 1
      %p72 = scmp.eq.s32.totalorder %s20, 1
      %p73 = scmp.ne.s32.totalorder %s68, %s70
      %p74 = scmp.eq.s32.totalorder %s20, 0
      %p75 = por %p73, %p74
      %p76 = scmp.ne.s32.totalorder %s68, %s70
      %p77 = scmp.eq.s32.totalorder %s25, 1
      %p78 = por %p76, %p77
      %p79 = scmp.ne.s32.totalorder %s70, %s71
      %p80 = scmp.eq.s32.totalorder %s25, 0
      %p81 = por %p79, %p80
      %p82 = scmp.ne.s32.totalorder %s70, %s71
      %p83 = scmp.eq.s32.totalorder %s26, 1
      %p84 = por %p82, %p83
      %p86 = scmp.ne.s32.totalorder %s71, %s85
      %p87 = scmp.eq.s32.totalorder %s26, 0
      %p88 = por %p86, %p87
      %s90 = sadd.s32 %s89, 1
      %p93 = scmp.eq.s32.totalorder %s20, 1
      %p94 = scmp.ne.s32.totalorder %s89, %s91
      %p95 = scmp.eq.s32.totalorder %s20, 0
      %p96 = por %p94, %p95
      %p97 = scmp.ne.s32.totalorder %s89, %s91
      %p98 = scmp.eq.s32.totalorder %s25, 1
      %p99 = por %p97, %p98
      %p100 = scmp.ne.s32.totalorder %s91, %s92
      %p101 = scmp.eq.s32.totalorder %s25, 0
      %p102 = por %p100, %p101
      %p103 = scmp.ne.s32.totalorder %s91, %s92
      %p104 = scmp.eq.s32.totalorder %s26, 1
      %p105 = por %p103, %p104
      %p107 = scmp.ne.s32.totalorder %s92, %s106
      %p108 = scmp.eq.s32.totalorder %s26, 0
      %p109 = por %p107, %p108
      %s111 = sadd.s32 %s110, 1
      %p114 = scmp.eq.s32.totalorder %s20, 1
      %p115 = scmp.ne.s32.totalorder %s110, %s112
      %p116 = scmp.eq.s32.totalorder %s20, 0
      %p117 = por %p115, %p116
      %p118 = scmp.ne.s32.totalorder %s110, %s112
      %p119 = scmp.eq.s32.totalorder %s25, 1
      %p120 = por %p118, %p119
      %p121 = scmp.ne.s32.totalorder %s112, %s113
      %p122 = scmp.eq.s32.totalorder %s25, 0
      %p123 = por %p121, %p122
      %p124 = scmp.ne.s32.totalorder %s112, %s113
      %p125 = scmp.eq.s32.totalorder %s26, 1
      %p126 = por %p124, %p125
      %p128 = scmp.ne.s32.totalorder %s113, %s127
      %p129 = scmp.eq.s32.totalorder %s26, 0
      %p130 = por %p128, %p129
      %s132 = sadd.s32 %s131, 1
      %p135 = scmp.eq.s32.totalorder %s20, 1
      %p136 = scmp.ne.s32.totalorder %s131, %s133
      %p137 = scmp.eq.s32.totalorder %s20, 0
      %p138 = por %p136, %p137
      %p139 = scmp.ne.s32.totalorder %s131, %s133
      %p140 = scmp.eq.s32.totalorder %s25, 1
      %p141 = por %p139, %p140
      %p142 = scmp.ne.s32.totalorder %s133, %s134
      %p143 = scmp.eq.s32.totalorder %s25, 0
      %p144 = por %p142, %p143
      %p145 = scmp.ne.s32.totalorder %s133, %s134
      %p146 = scmp.eq.s32.totalorder %s26, 1
      %p147 = por %p145, %p146
      %p149 = scmp.ne.s32.totalorder %s134, %s148
      %p150 = scmp.eq.s32.totalorder %s26, 0
      %p151 = por %p149, %p150
      %s153 = sadd.s32 %s152, 1
      %p156 = scmp.eq.s32.totalorder %s20, 1
      %p157 = scmp.ne.s32.totalorder %s152, %s154
      %p158 = scmp.eq.s32.totalorder %s20, 0
      %p159 = por %p157, %p158
      %p160 = scmp.ne.s32.totalorder %s152, %s154
      %p161 = scmp.eq.s32.totalorder %s25, 1
      %p162 = por %p160, %p161
      %p163 = scmp.ne.s32.totalorder %s154, %s155
      %p164 = scmp.eq.s32.totalorder %s25, 0
      %p165 = por %p163, %p164
      %p166 = scmp.ne.s32.totalorder %s154, %s155
      %p167 = scmp.eq.s32.totalorder %s26, 1
      %p168 = por %p166, %p167
      %p170 = scmp.ne.s32.totalorder %s155, %s169
      %p171 = scmp.eq.s32.totalorder %s26, 0
      %p172 = por %p170, %p171
      %s174 = sadd.s32 %s173, 1
      %p177 = scmp.eq.s32.totalorder %s20, 1
      %p178 = scmp.ne.s32.totalorder %s173, %s175
      %p179 = scmp.eq.s32.totalorder %s20, 0
      %p180 = por %p178, %p179
      %p181 = scmp.ne.s32.totalorder %s173, %s175
      %p182 = scmp.eq.s32.totalorder %s25, 1
      %p183 = por %p181, %p182
      %p184 = scmp.ne.s32.totalorder %s175, %s176
      %p185 = scmp.eq.s32.totalorder %s25, 0
      %p186 = por %p184, %p185
      %p187 = scmp.ne.s32.totalorder %s175, %s176
      %p188 = scmp.eq.s32.totalorder %s26, 1
      %p189 = por %p187, %p188
      %p191 = scmp.ne.s32.totalorder %s176, %s190
      %p192 = scmp.eq.s32.totalorder %s26, 0
      %p193 = por %p191, %p192
      %s194 = ssub.s32 %s27, %s39
      %p195 = scmp.eq.s32.totalorder %s194, 0
      %s197 = sadd.s32 %s196, 1
      %s198 = scalar_select %p195, %s196, %s197
      %p201 = pneg %p195
      %p202 = scmp.eq.s32.totalorder %s20, 1
      %p203 = por %p201, %p202
      %p204 = scmp.ne.s32.totalorder %s196, %s199
      %p205 = scmp.eq.s32.totalorder %s20, 0
      %p206 = por %p204, %p205
      %p207 = scmp.ne.s32.totalorder %s196, %s199
      %p208 = scmp.eq.s32.totalorder %s25, 1
      %p209 = por %p207, %p208
      %p210 = scmp.ne.s32.totalorder %s199, %s200
      %p211 = scmp.eq.s32.totalorder %s25, 0
      %p212 = por %p210, %p211
      %p213 = scmp.ne.s32.totalorder %s199, %s200
      %p214 = scmp.eq.s32.totalorder %s26, 1
      %p215 = por %p213, %p214
      %p217 = scmp.ne.s32.totalorder %s200, %s216
      %p218 = scmp.eq.s32.totalorder %s26, 0
      %p219 = por %p217, %p218
      %s220 = ssub.s32 %s27, %s39
      %p221 = scmp.eq.s32.totalorder %s220, 0
      %s223 = sadd.s32 %s222, 1
      %s224 = scalar_select %p221, %s222, %s223
      %p227 = pneg %p221
      %p228 = scmp.eq.s32.totalorder %s20, 1
      %p229 = por %p227, %p228
      %p230 = scmp.ne.s32.totalorder %s222, %s225
      %p231 = scmp.eq.s32.totalorder %s20, 0
      %p232 = por %p230, %p231
      %p233 = scmp.ne.s32.totalorder %s222, %s225
      %p234 = scmp.eq.s32.totalorder %s25, 1
      %p235 = por %p233, %p234
      %p236 = scmp.ne.s32.totalorder %s225, %s226
      %p237 = scmp.eq.s32.totalorder %s25, 0
      %p238 = por %p236, %p237
      %p239 = scmp.ne.s32.totalorder %s225, %s226
      %p240 = scmp.eq.s32.totalorder %s26, 1
      %p241 = por %p239, %p240
      %p243 = scmp.ne.s32.totalorder %s226, %s242
      %p244 = scmp.eq.s32.totalorder %s26, 0
      %p245 = por %p243, %p244
      %p246 = scmp.le.s32.totalorder 1, %s20
      %p247 = scmp.lt.s32.totalorder %s20, 3
      %p248 = pnand %p246, %p247
      %p249 = pneg %p248
      // Predicated region
      $region9: #{tpu_custom_call.1} parent=5 // pred_check
        _
      $region10: #{tpu_custom_call.1} parent=5 // pred_check_branch
        %251 = sbr.rel (%p248) target = $region12
      $region11: #{tpu_custom_call.1} parent=5 // pred_region
        %s252 = ssub.s32 %s20, 1
        // Predicated region
        $region13: #{tpu_custom_call.1} parent=11 // pred_check
          %p253 = pneg %p81
        $region14: #{tpu_custom_call.1} parent=11 // pred_check_branch
          %255 = sbr.rel (%p253) target = $region16
        $region15: #{tpu_custom_call.1} parent=11 // pred_region
          _
        $region16: #{tpu_custom_call.1} parent=11 // pred_fallthru
          _
        // Predicated region
        $region17: #{tpu_custom_call.1} parent=11 // pred_check
          %p256 = pneg %p102
        $region18: #{tpu_custom_call.1} parent=11 // pred_check_branch
          %258 = sbr.rel (%p256) target = $region20
        $region19: #{tpu_custom_call.1} parent=11 // pred_region
          _
        $region20: #{tpu_custom_call.1} parent=11 // pred_fallthru
          _
        // Predicated region
        $region21: #{tpu_custom_call.1} parent=11 // pred_check
          %p259 = pneg %p123
        $region22: #{tpu_custom_call.1} parent=11 // pred_check_branch
          %261 = sbr.rel (%p259) target = $region24
        $region23: #{tpu_custom_call.1} parent=11 // pred_region
          _
        $region24: #{tpu_custom_call.1} parent=11 // pred_fallthru
          _
        // Predicated region
        $region25: #{tpu_custom_call.1} parent=11 // pred_check
          %p262 = pneg %p144
        $region26: #{tpu_custom_call.1} parent=11 // pred_check_branch
          %264 = sbr.rel (%p262) target = $region28
        $region27: #{tpu_custom_call.1} parent=11 // pred_region
          _
        $region28: #{tpu_custom_call.1} parent=11 // pred_fallthru
          _
        // Predicated region
        $region29: #{tpu_custom_call.1} parent=11 // pred_check
          %p265 = pneg %p165
        $region30: #{tpu_custom_call.1} parent=11 // pred_check_branch
          %267 = sbr.rel (%p265) target = $region32
        $region31: #{tpu_custom_call.1} parent=11 // pred_region
          _
        $region32: #{tpu_custom_call.1} parent=11 // pred_fallthru
          _
        // Predicated region
        $region33: #{tpu_custom_call.1} parent=11 // pred_check
          %p268 = pneg %p186
        $region34: #{tpu_custom_call.1} parent=11 // pred_check_branch
          %270 = sbr.rel (%p268) target = $region36
        $region35: #{tpu_custom_call.1} parent=11 // pred_region
          _
        $region36: #{tpu_custom_call.1} parent=11 // pred_fallthru
          _
      $region12: #{tpu_custom_call.1} parent=5 // pred_fallthru
        _
      %p271 = scmp.lt.s32.totalorder %s20, 2
      // Predicated region
      $region37: #{tpu_custom_call.1} parent=5 // pred_check
        %p272 = pneg %p271
      $region38: #{tpu_custom_call.1} parent=5 // pred_check_branch
        %274 = sbr.rel (%p272) target = $region40
      $region39: #{tpu_custom_call.1} parent=5 // pred_region
        // Predicated region
        $region41: #{tpu_custom_call.1} parent=39 // pred_check
          %p275 = pneg %p54
        $region42: #{tpu_custom_call.1} parent=39 // pred_check_branch
          %277 = sbr.rel (%p275) target = $region44
        $region43: #{tpu_custom_call.1} parent=39 // pred_region
          %s278 = smul.u32 8, %s27
          %s279 = smul.u32 5, %s28
          %p280 = scmp.lt.s32.totalorder %s278, 15
          %s281 = scalar_select %p280, %s278, 15
          %p282 = scmp.lt.s32.totalorder %s279, 4
          %s283 = scalar_select %p282, %s279, 4
          %s284 = smul.addr %s281, 5
          %s285 = sadd.s32 %s283, %s284
          %s286 = smul.addr %s285, 4
          %s287 = scalar_lea.vmem %s0, %s286
          %s288 = smul.u32 8, %s27
          %s289 = smul.u32 5, %s28
        $region44: #{tpu_custom_call.1} parent=39 // pred_fallthru
          _
      $region40: #{tpu_custom_call.1} parent=5 // pred_fallthru
        _
      %p290 = scmp.le.s32.totalorder 1, %s20
      %p291 = scmp.lt.s32.totalorder %s20, 3
      %p292 = pnand %p290, %p291
      %p293 = pneg %p292
      // Predicated region
      $region45: #{tpu_custom_call.1} parent=5 // pred_check
        _
      $region46: #{tpu_custom_call.1} parent=5 // pred_check_branch
        %295 = sbr.rel (%p292) target = $region48
      $region47: #{tpu_custom_call.1} parent=5 // pred_region
        %s296 = ssub.s32 %s20, 1
        %s297 = smul.u32 8, %s29
        %s298 = smul.u32 5, %s30
        %p299 = scmp.lt.s32.totalorder %s297, 15
        %s300 = scalar_select %p299, %s297, 15
        %p301 = scmp.lt.s32.totalorder %s298, 4
        %s302 = scalar_select %p301, %s298, 4
        %s303 = smul.addr %s300, 5
        %s304 = sadd.s32 %s302, %s303
        %s305 = smul.addr %s304, 4
        %s306 = scalar_lea.vmem %s0, %s305
        %p307 = pneg %p60
        %p308 = pneg %p57
        %p309 = pneg %p81
        %p310 = pneg %p78
        %p311 = pneg %p102
        %p312 = pneg %p99
        %p313 = pneg %p123
        %p314 = pneg %p120
        %p315 = pneg %p144
        %p316 = pneg %p141
        %p317 = pneg %p165
        %p318 = pneg %p162
        %p319 = pneg %p186
        %p320 = pneg %p183
        %p321 = pneg %p212
        %p322 = pneg %p209
        %s323 = sand.u32 %s199, 1
        %s324 = scalar_lea.sflag [#allocation5], %s323
        %s325 = sand.u32 %s199, 1
        %s326 = smul.addr %s325, 8
        %s327 = scalar_lea.vmem [#allocation4], %s326
        %p328 = pneg %p238
        %p329 = pneg %p235
        %p330 = scmp.lt.s32.totalorder %s29, 1
        %s331 = scalar_select %p330, %s29, 1
        %s332 = smul.addr %s331, 8
        %s333 = scalar_lea.vmem %s8, %s332
        %s334 = smul.u32 8, %s29
        %s335 = smul.u32 5, %s30
        %p336 = scmp.lt.s32.totalorder %s334, 15
        %s337 = scalar_select %p336, %s334, 15
        %p338 = scmp.lt.s32.totalorder %s335, 4
        %s339 = scalar_select %p338, %s335, 4
        %s340 = smul.addr %s337, 5
        %s341 = sadd.s32 %s339, %s340
        %s342 = smul.addr %s341, 4
        %s343 = scalar_lea.vmem %s0, %s342
        %s344 = smul.u32 8, %s29
        %s345 = smul.u32 5, %s30
        %p346 = scmp.lt.s32.totalorder %s29, 1
        %s347 = scalar_select %p346, %s29, 1
        %s348 = smul.addr %s347, 8
        %s349 = scalar_lea.vmem %s8, %s348
        %p352 = scmp.eq.s32.totalorder %s30, 0
        // Predicated region
        $region49: #{tpu_custom_call.1} parent=47 // pred_check
          %p353 = pneg %p352
        $region50: #{tpu_custom_call.1} parent=47 // pred_check_branch
          %355 = sbr.rel (%p353) target = $region52
        $region51: #{tpu_custom_call.1} parent=47 // pred_region
          %vm356 = vcmask 261120
          %357 = vst.msk [vmem:[#allocation2] sm:$0xff] %vm356, 0.0
        $region52: #{tpu_custom_call.1} parent=47 // pred_fallthru
          _
        %v358 = vld [vmem:[%s343] sm:$0xf]
        %v359 = vld [vmem:[%s343 + $0x4] sm:$0xf]
        %v360 = vld [vmem:[%s343 + $0x8] sm:$0xf]
        %v361 = vld [vmem:[%s343 + $0xc] sm:$0xf]
        %v362 = vld [vmem:[%s343 + $0x10] sm:$0xf]
        %v363 = vld [vmem:[%s343 + $0x14] sm:$0xf]
        %v364 = vld [vmem:[%s343 + $0x18] sm:$0xf]
        %v365 = vld [vmem:[%s343 + $0x1c] sm:$0xf]
        %v366 = vld [vmem:[%s343 + $0x20] sm:$0xf]
        %v367 = vld [vmem:[%s343 + $0x24] sm:$0xf]
        %v368 = vld [vmem:[%s343 + $0x28] sm:$0xf]
        %v369 = vld [vmem:[%s343 + $0x2c] sm:$0xf]
        %v370 = vld [vmem:[%s343 + $0x30] sm:$0xf]
        %v371 = vld [vmem:[%s343 + $0x34] sm:$0xf]
        %v372 = vld [vmem:[%s343 + $0x38] sm:$0xf]
        %v373 = vld [vmem:[%s343 + $0x3c] sm:$0xf]
        %v374 = vld [vmem:[%s343 + $0x40] sm:$0xf]
        %v375 = vld [vmem:[%s343 + $0x44] sm:$0xf]
        %v376 = vld [vmem:[%s343 + $0x48] sm:$0xf]
        %v377 = vld [vmem:[%s343 + $0x4c] sm:$0xf]
        %v378 = vld [vmem:[%s343 + $0x50] sm:$0xf]
        %v379 = vld [vmem:[%s343 + $0x54] sm:$0xf]
        %v380 = vld [vmem:[%s343 + $0x58] sm:$0xf]
        %v381 = vld [vmem:[%s343 + $0x5c] sm:$0xf]
        %v382 = vld [vmem:[%s343 + $0x60] sm:$0xf]
        %v383 = vld [vmem:[%s343 + $0x64] sm:$0xf]
        %v384 = vld [vmem:[%s343 + $0x68] sm:$0xf]
        %v385 = vld [vmem:[%s343 + $0x6c] sm:$0xf]
        %v386 = vld [vmem:[%s343 + $0x70] sm:$0xf]
        %v387 = vld [vmem:[%s343 + $0x74] sm:$0xf]
        %v388 = vld [vmem:[%s343 + $0x78] sm:$0xf]
        %v389 = vld [vmem:[%s343 + $0x7c] sm:$0xf]
        %v390 = vld [vmem:[%s343 + $0x80] sm:$0xf]
        %v391 = vld [vmem:[%s343 + $0x84] sm:$0xf]
        %v392 = vld [vmem:[%s343 + $0x88] sm:$0xf]
        %v393 = vld [vmem:[%s343 + $0x8c] sm:$0xf]
        %v394 = vld [vmem:[%s343 + $0x90] sm:$0xf]
        %v395 = vld [vmem:[%s343 + $0x94] sm:$0xf]
        %v396 = vld [vmem:[%s343 + $0x98] sm:$0xf]
        %v397 = vld [vmem:[%s343 + $0x9c] sm:$0xf]
        %v403 = vunpack.c.l.b16 %v358
        %v404 = vunpack.c.l.b16 %v359
        %v405 = vunpack.c.l.b16 %v360
        %v406 = vunpack.c.l.b16 %v361
        %v407 = vunpack.c.l.b16 %v362
        %v408 = vpack.c.b16 %v404, %v403
        %v409 = vpack.c.b16 %v406, %v405
        %v410 = vpack.c.b16 %v407, %v407
        %vm413 = vcmask 326656
        %v415 = vsel %vm413, 1065369472, 0
        %vm417 = vcmask 1043456
        %v419 = vsel %vm417, %v410, 0
        %421 = vmatprep.subr.bf16.mxu0 0
        %422 = vmatpush1.bf16.msra.mxu0 %v408
        %423 = vmatprep.subr.bf16.mxu0 0
        %424 = vmatpush1.bf16.msra.mxu0 %v409
        %425 = vmatprep.subr.bf16.mxu0 0
        %426 = vmatpush1.bf16.msra.mxu0 %v419
        %427 = vmatprep.subr.bf16.mxu0 0
        %428 = vmatpush1.bf16.msra.mxu0 0
        %429 = vmatprep.subr.bf16.mxu0 0
        %430 = vmatpush1.bf16.msra.mxu0 0
        %431 = vmatprep.subr.bf16.mxu0 0
        %432 = vmatpush1.bf16.msra.mxu0 0
        %433 = vmatprep.subr.bf16.mxu0 0
        %434 = vmatpush1.bf16.msra.mxu0 0
        %435 = vmatprep.subr.bf16.mxu0 0
        %436 = vmatpush1.bf16.msra.mxu0 0
        %437 = vmatprep.subr.bf16.mxu0 0
        %438 = vmatpush1.bf16.msra.mxu0 0
        %439 = vmatprep.subr.bf16.mxu0 0
        %440 = vmatpush1.bf16.msra.mxu0 0
        %441 = vmatprep.subr.bf16.mxu0 0
        %442 = vmatpush1.bf16.msra.mxu0 0
        %443 = vmatprep.subr.bf16.mxu0 0
        %444 = vmatpush1.bf16.msra.mxu0 0
        %445 = vmatprep.subr.bf16.mxu0 0
        %446 = vmatpush1.bf16.msra.mxu0 0
        %447 = vmatprep.subr.bf16.mxu0 0
        %448 = vmatpush1.bf16.msra.mxu0 0
        %449 = vmatprep.subr.bf16.mxu0 0
        %450 = vmatpush1.bf16.msra.mxu0 0
        %451 = vmatprep.subr.bf16.mxu0 0
        %452 = vmatpush1.bf16.msra.mxu0 0
        %453 = vmatprep.mubr.bf16.mxu0 0
        %454 = vmatmul.mubr.bf16.gmra.mrb[0].mxu0 %v415
        %v455 = vpop.f32.mrb[0].mxu0
        %v456 = vadd.f32 0.0, %v455
        %v457 = vpop.f32.mrb[0].mxu0
        %v458 = vpop.f32.mrb[0].mxu0
        %v459 = vpop.f32.mrb[0].mxu0
        %460 = vdwg.mxu0
        %v466 = vunpack.c.l.b16 %v363
        %v467 = vunpack.c.l.b16 %v364
        %v468 = vunpack.c.l.b16 %v365
        %v469 = vunpack.c.l.b16 %v366
        %v470 = vunpack.c.l.b16 %v367
        %v471 = vpack.c.b16 %v467, %v466
        %v472 = vpack.c.b16 %v469, %v468
        %v473 = vpack.c.b16 %v470, %v470
        %v477 = vsel %vm417, %v473, 0
        %479 = vmatprep.subr.bf16.mxu0 0
        %480 = vmatpush1.bf16.msra.mxu0 %v471
        %481 = vmatprep.subr.bf16.mxu0 0
        %482 = vmatpush1.bf16.msra.mxu0 %v472
        %483 = vmatprep.subr.bf16.mxu0 0
        %484 = vmatpush1.bf16.msra.mxu0 %v477
        %485 = vmatprep.subr.bf16.mxu0 0
        %486 = vmatpush1.bf16.msra.mxu0 0
        %487 = vmatprep.subr.bf16.mxu0 0
        %488 = vmatpush1.bf16.msra.mxu0 0
        %489 = vmatprep.subr.bf16.mxu0 0
        %490 = vmatpush1.bf16.msra.mxu0 0
        %491 = vmatprep.subr.bf16.mxu0 0
        %492 = vmatpush1.bf16.msra.mxu0 0
        %493 = vmatprep.subr.bf16.mxu0 0
        %494 = vmatpush1.bf16.msra.mxu0 0
        %495 = vmatprep.subr.bf16.mxu0 0
        %496 = vmatpush1.bf16.msra.mxu0 0
        %497 = vmatprep.subr.bf16.mxu0 0
        %498 = vmatpush1.bf16.msra.mxu0 0
        %499 = vmatprep.subr.bf16.mxu0 0
        %500 = vmatpush1.bf16.msra.mxu0 0
        %501 = vmatprep.subr.bf16.mxu0 0
        %502 = vmatpush1.bf16.msra.mxu0 0
        %503 = vmatprep.subr.bf16.mxu0 0
        %504 = vmatpush1.bf16.msra.mxu0 0
        %505 = vmatprep.subr.bf16.mxu0 0
        %506 = vmatpush1.bf16.msra.mxu0 0
        %507 = vmatprep.subr.bf16.mxu0 0
        %508 = vmatpush1.bf16.msra.mxu0 0
        %509 = vmatprep.subr.bf16.mxu0 0
        %510 = vmatpush1.bf16.msra.mxu0 0
        %511 = vmatprep.mubr.bf16.mxu0 0
        %512 = vmatmul.mubr.bf16.gmra.mrb[0].mxu0 %v415
        %v513 = vpop.f32.mrb[0].mxu0
        %v514 = vadd.f32 0.0, %v513
        %v515 = vpop.f32.mrb[0].mxu0
        %v516 = vpop.f32.mrb[0].mxu0
        %v517 = vpop.f32.mrb[0].mxu0
        %518 = vdwg.mxu0
        %v524 = vunpack.c.l.b16 %v368
        %v525 = vunpack.c.l.b16 %v369
        %v526 = vunpack.c.l.b16 %v370
        %v527 = vunpack.c.l.b16 %v371
        %v528 = vunpack.c.l.b16 %v372
        %v529 = vpack.c.b16 %v525, %v524
        %v530 = vpack.c.b16 %v527, %v526
        %v531 = vpack.c.b16 %v528, %v528
        %v535 = vsel %vm417, %v531, 0
        %537 = vmatprep.subr.bf16.mxu0 0
        %538 = vmatpush1.bf16.msra.mxu0 %v529
        %539 = vmatprep.subr.bf16.mxu0 0
        %540 = vmatpush1.bf16.msra.mxu0 %v530
        %541 = vmatprep.subr.bf16.mxu0 0
        %542 = vmatpush1.bf16.msra.mxu0 %v535
        %543 = vmatprep.subr.bf16.mxu0 0
        %544 = vmatpush1.bf16.msra.mxu0 0
        %545 = vmatprep.subr.bf16.mxu0 0
        %546 = vmatpush1.bf16.msra.mxu0 0
        %547 = vmatprep.subr.bf16.mxu0 0
        %548 = vmatpush1.bf16.msra.mxu0 0
        %549 = vmatprep.subr.bf16.mxu0 0
        %550 = vmatpush1.bf16.msra.mxu0 0
        %551 = vmatprep.subr.bf16.mxu0 0
        %552 = vmatpush1.bf16.msra.mxu0 0
        %553 = vmatprep.subr.bf16.mxu0 0
        %554 = vmatpush1.bf16.msra.mxu0 0
        %555 = vmatprep.subr.bf16.mxu0 0
        %556 = vmatpush1.bf16.msra.mxu0 0
        %557 = vmatprep.subr.bf16.mxu0 0
        %558 = vmatpush1.bf16.msra.mxu0 0
        %559 = vmatprep.subr.bf16.mxu0 0
        %560 = vmatpush1.bf16.msra.mxu0 0
        %561 = vmatprep.subr.bf16.mxu0 0
        %562 = vmatpush1.bf16.msra.mxu0 0
        %563 = vmatprep.subr.bf16.mxu0 0
        %564 = vmatpush1.bf16.msra.mxu0 0
        %565 = vmatprep.subr.bf16.mxu0 0
        %566 = vmatpush1.bf16.msra.mxu0 0
        %567 = vmatprep.subr.bf16.mxu0 0
        %568 = vmatpush1.bf16.msra.mxu0 0
        %569 = vmatprep.mubr.bf16.mxu0 0
        %570 = vmatmul.mubr.bf16.gmra.mrb[0].mxu0 %v415
        %v571 = vpop.f32.mrb[0].mxu0
        %v572 = vadd.f32 0.0, %v571
        %v573 = vpop.f32.mrb[0].mxu0
        %v574 = vpop.f32.mrb[0].mxu0
        %v575 = vpop.f32.mrb[0].mxu0
        %576 = vdwg.mxu0
        %v582 = vunpack.c.l.b16 %v373
        %v583 = vunpack.c.l.b16 %v374
        %v584 = vunpack.c.l.b16 %v375
        %v585 = vunpack.c.l.b16 %v376
        %v586 = vunpack.c.l.b16 %v377
        %v587 = vpack.c.b16 %v583, %v582
        %v588 = vpack.c.b16 %v585, %v584
        %v589 = vpack.c.b16 %v586, %v586
        %v593 = vsel %vm417, %v589, 0
        %595 = vmatprep.subr.bf16.mxu0 0
        %596 = vmatpush1.bf16.msra.mxu0 %v587
        %597 = vmatprep.subr.bf16.mxu0 0
        %598 = vmatpush1.bf16.msra.mxu0 %v588
        %599 = vmatprep.subr.bf16.mxu0 0
        %600 = vmatpush1.bf16.msra.mxu0 %v593
        %601 = vmatprep.subr.bf16.mxu0 0
        %602 = vmatpush1.bf16.msra.mxu0 0
        %603 = vmatprep.subr.bf16.mxu0 0
        %604 = vmatpush1.bf16.msra.mxu0 0
        %605 = vmatprep.subr.bf16.mxu0 0
        %606 = vmatpush1.bf16.msra.mxu0 0
        %607 = vmatprep.subr.bf16.mxu0 0
        %608 = vmatpush1.bf16.msra.mxu0 0
        %609 = vmatprep.subr.bf16.mxu0 0
        %610 = vmatpush1.bf16.msra.mxu0 0
        %611 = vmatprep.subr.bf16.mxu0 0
        %612 = vmatpush1.bf16.msra.mxu0 0
        %613 = vmatprep.subr.bf16.mxu0 0
        %614 = vmatpush1.bf16.msra.mxu0 0
        %615 = vmatprep.subr.bf16.mxu0 0
        %616 = vmatpush1.bf16.msra.mxu0 0
        %617 = vmatprep.subr.bf16.mxu0 0
        %618 = vmatpush1.bf16.msra.mxu0 0
        %619 = vmatprep.subr.bf16.mxu0 0
        %620 = vmatpush1.bf16.msra.mxu0 0
        %621 = vmatprep.subr.bf16.mxu0 0
        %622 = vmatpush1.bf16.msra.mxu0 0
        %623 = vmatprep.subr.bf16.mxu0 0
        %624 = vmatpush1.bf16.msra.mxu0 0
        %625 = vmatprep.subr.bf16.mxu0 0
        %626 = vmatpush1.bf16.msra.mxu0 0
        %627 = vmatprep.mubr.bf16.mxu0 0
        %628 = vmatmul.mubr.bf16.gmra.mrb[0].mxu0 %v415
        %v629 = vpop.f32.mrb[0].mxu0
        %v630 = vadd.f32 0.0, %v629
        %v631 = vpop.f32.mrb[0].mxu0
        %v632 = vpop.f32.mrb[0].mxu0
        %v633 = vpop.f32.mrb[0].mxu0
        %634 = vdwg.mxu0
        %v640 = vunpack.c.l.b16 %v378
        %v641 = vunpack.c.l.b16 %v379
        %v642 = vunpack.c.l.b16 %v380
        %v643 = vunpack.c.l.b16 %v381
        %v644 = vunpack.c.l.b16 %v382
        %v645 = vpack.c.b16 %v641, %v640
        %v646 = vpack.c.b16 %v643, %v642
        %v647 = vpack.c.b16 %v644, %v644
        %v651 = vsel %vm417, %v647, 0
        %653 = vmatprep.subr.bf16.mxu0 0
        %654 = vmatpush1.bf16.msra.mxu0 %v645
        %655 = vmatprep.subr.bf16.mxu0 0
        %656 = vmatpush1.bf16.msra.mxu0 %v646
        %657 = vmatprep.subr.bf16.mxu0 0
        %658 = vmatpush1.bf16.msra.mxu0 %v651
        %659 = vmatprep.subr.bf16.mxu0 0
        %660 = vmatpush1.bf16.msra.mxu0 0
        %661 = vmatprep.subr.bf16.mxu0 0
        %662 = vmatpush1.bf16.msra.mxu0 0
        %663 = vmatprep.subr.bf16.mxu0 0
        %664 = vmatpush1.bf16.msra.mxu0 0
        %665 = vmatprep.subr.bf16.mxu0 0
        %666 = vmatpush1.bf16.msra.mxu0 0
        %667 = vmatprep.subr.bf16.mxu0 0
        %668 = vmatpush1.bf16.msra.mxu0 0
        %669 = vmatprep.subr.bf16.mxu0 0
        %670 = vmatpush1.bf16.msra.mxu0 0
        %671 = vmatprep.subr.bf16.mxu0 0
        %672 = vmatpush1.bf16.msra.mxu0 0
        %673 = vmatprep.subr.bf16.mxu0 0
        %674 = vmatpush1.bf16.msra.mxu0 0
        %675 = vmatprep.subr.bf16.mxu0 0
        %676 = vmatpush1.bf16.msra.mxu0 0
        %677 = vmatprep.subr.bf16.mxu0 0
        %678 = vmatpush1.bf16.msra.mxu0 0
        %679 = vmatprep.subr.bf16.mxu0 0
        %680 = vmatpush1.bf16.msra.mxu0 0
        %681 = vmatprep.subr.bf16.mxu0 0
        %682 = vmatpush1.bf16.msra.mxu0 0
        %683 = vmatprep.subr.bf16.mxu0 0
        %684 = vmatpush1.bf16.msra.mxu0 0
        %685 = vmatprep.mubr.bf16.mxu0 0
        %686 = vmatmul.mubr.bf16.gmra.mrb[0].mxu0 %v415
        %v687 = vpop.f32.mrb[0].mxu0
        %v688 = vadd.f32 0.0, %v687
        %v689 = vpop.f32.mrb[0].mxu0
        %v690 = vpop.f32.mrb[0].mxu0
        %v691 = vpop.f32.mrb[0].mxu0
        %692 = vdwg.mxu0
        %v698 = vunpack.c.l.b16 %v383
        %v699 = vunpack.c.l.b16 %v384
        %v700 = vunpack.c.l.b16 %v385
        %v701 = vunpack.c.l.b16 %v386
        %v702 = vunpack.c.l.b16 %v387
        %v703 = vpack.c.b16 %v699, %v698
        %v704 = vpack.c.b16 %v701, %v700
        %v705 = vpack.c.b16 %v702, %v702
        %v709 = vsel %vm417, %v705, 0
        %711 = vmatprep.subr.bf16.mxu0 0
        %712 = vmatpush1.bf16.msra.mxu0 %v703
        %713 = vmatprep.subr.bf16.mxu0 0
        %714 = vmatpush1.bf16.msra.mxu0 %v704
        %715 = vmatprep.subr.bf16.mxu0 0
        %716 = vmatpush1.bf16.msra.mxu0 %v709
        %717 = vmatprep.subr.bf16.mxu0 0
        %718 = vmatpush1.bf16.msra.mxu0 0
        %719 = vmatprep.subr.bf16.mxu0 0
        %720 = vmatpush1.bf16.msra.mxu0 0
        %721 = vmatprep.subr.bf16.mxu0 0
        %722 = vmatpush1.bf16.msra.mxu0 0
        %723 = vmatprep.subr.bf16.mxu0 0
        %724 = vmatpush1.bf16.msra.mxu0 0
        %725 = vmatprep.subr.bf16.mxu0 0
        %726 = vmatpush1.bf16.msra.mxu0 0
        %727 = vmatprep.subr.bf16.mxu0 0
        %728 = vmatpush1.bf16.msra.mxu0 0
        %729 = vmatprep.subr.bf16.mxu0 0
        %730 = vmatpush1.bf16.msra.mxu0 0
        %731 = vmatprep.subr.bf16.mxu0 0
        %732 = vmatpush1.bf16.msra.mxu0 0
        %733 = vmatprep.subr.bf16.mxu0 0
        %734 = vmatpush1.bf16.msra.mxu0 0
        %735 = vmatprep.subr.bf16.mxu0 0
        %736 = vmatpush1.bf16.msra.mxu0 0
        %737 = vmatprep.subr.bf16.mxu0 0
        %738 = vmatpush1.bf16.msra.mxu0 0
        %739 = vmatprep.subr.bf16.mxu0 0
        %740 = vmatpush1.bf16.msra.mxu0 0
        %741 = vmatprep.subr.bf16.mxu0 0
        %742 = vmatpush1.bf16.msra.mxu0 0
        %743 = vmatprep.mubr.bf16.mxu0 0
        %744 = vmatmul.mubr.bf16.gmra.mrb[0].mxu0 %v415
        %v745 = vpop.f32.mrb[0].mxu0
        %v746 = vadd.f32 0.0, %v745
        %v747 = vpop.f32.mrb[0].mxu0
        %v748 = vpop.f32.mrb[0].mxu0
        %v749 = vpop.f32.mrb[0].mxu0
        %750 = vdwg.mxu0
        %v756 = vunpack.c.l.b16 %v388
        %v757 = vunpack.c.l.b16 %v389
        %v758 = vunpack.c.l.b16 %v390
        %v759 = vunpack.c.l.b16 %v391
        %v760 = vunpack.c.l.b16 %v392
        %v761 = vpack.c.b16 %v757, %v756
        %v762 = vpack.c.b16 %v759, %v758
        %v763 = vpack.c.b16 %v760, %v760
        %v767 = vsel %vm417, %v763, 0
        %769 = vmatprep.subr.bf16.mxu0 0
        %770 = vmatpush1.bf16.msra.mxu0 %v761
        %771 = vmatprep.subr.bf16.mxu0 0
        %772 = vmatpush1.bf16.msra.mxu0 %v762
        %773 = vmatprep.subr.bf16.mxu0 0
        %774 = vmatpush1.bf16.msra.mxu0 %v767
        %775 = vmatprep.subr.bf16.mxu0 0
        %776 = vmatpush1.bf16.msra.mxu0 0
        %777 = vmatprep.subr.bf16.mxu0 0
        %778 = vmatpush1.bf16.msra.mxu0 0
        %779 = vmatprep.subr.bf16.mxu0 0
        %780 = vmatpush1.bf16.msra.mxu0 0
        %781 = vmatprep.subr.bf16.mxu0 0
        %782 = vmatpush1.bf16.msra.mxu0 0
        %783 = vmatprep.subr.bf16.mxu0 0
        %784 = vmatpush1.bf16.msra.mxu0 0
        %785 = vmatprep.subr.bf16.mxu0 0
        %786 = vmatpush1.bf16.msra.mxu0 0
        %787 = vmatprep.subr.bf16.mxu0 0
        %788 = vmatpush1.bf16.msra.mxu0 0
        %789 = vmatprep.subr.bf16.mxu0 0
        %790 = vmatpush1.bf16.msra.mxu0 0
        %791 = vmatprep.subr.bf16.mxu0 0
        %792 = vmatpush1.bf16.msra.mxu0 0
        %793 = vmatprep.subr.bf16.mxu0 0
        %794 = vmatpush1.bf16.msra.mxu0 0
        %795 = vmatprep.subr.bf16.mxu0 0
        %796 = vmatpush1.bf16.msra.mxu0 0
        %797 = vmatprep.subr.bf16.mxu0 0
        %798 = vmatpush1.bf16.msra.mxu0 0
        %799 = vmatprep.subr.bf16.mxu0 0
        %800 = vmatpush1.bf16.msra.mxu0 0
        %801 = vmatprep.mubr.bf16.mxu0 0
        %802 = vmatmul.mubr.bf16.gmra.mrb[0].mxu0 %v415
        %v803 = vpop.f32.mrb[0].mxu0
        %v804 = vadd.f32 0.0, %v803
        %v805 = vpop.f32.mrb[0].mxu0
        %v806 = vpop.f32.mrb[0].mxu0
        %v807 = vpop.f32.mrb[0].mxu0
        %808 = vdwg.mxu0
        %v814 = vunpack.c.l.b16 %v393
        %v815 = vunpack.c.l.b16 %v394
        %v816 = vunpack.c.l.b16 %v395
        %v817 = vunpack.c.l.b16 %v396
        %v818 = vunpack.c.l.b16 %v397
        %v819 = vpack.c.b16 %v815, %v814
        %v820 = vpack.c.b16 %v817, %v816
        %v821 = vpack.c.b16 %v818, %v818
        %v825 = vsel %vm417, %v821, 0
        %827 = vmatprep.subr.bf16.mxu0 0
        %828 = vmatpush1.bf16.msra.mxu0 %v819
        %829 = vmatprep.subr.bf16.mxu0 0
        %830 = vmatpush1.bf16.msra.mxu0 %v820
        %831 = vmatprep.subr.bf16.mxu0 0
        %832 = vmatpush1.bf16.msra.mxu0 %v825
        %833 = vmatprep.subr.bf16.mxu0 0
        %834 = vmatpush1.bf16.msra.mxu0 0
        %835 = vmatprep.subr.bf16.mxu0 0
        %836 = vmatpush1.bf16.msra.mxu0 0
        %837 = vmatprep.subr.bf16.mxu0 0
        %838 = vmatpush1.bf16.msra.mxu0 0
        %839 = vmatprep.subr.bf16.mxu0 0
        %840 = vmatpush1.bf16.msra.mxu0 0
        %841 = vmatprep.subr.bf16.mxu0 0
        %842 = vmatpush1.bf16.msra.mxu0 0
        %843 = vmatprep.subr.bf16.mxu0 0
        %844 = vmatpush1.bf16.msra.mxu0 0
        %845 = vmatprep.subr.bf16.mxu0 0
        %846 = vmatpush1.bf16.msra.mxu0 0
        %847 = vmatprep.subr.bf16.mxu0 0
        %848 = vmatpush1.bf16.msra.mxu0 0
        %849 = vmatprep.subr.bf16.mxu0 0
        %850 = vmatpush1.bf16.msra.mxu0 0
        %851 = vmatprep.subr.bf16.mxu0 0
        %852 = vmatpush1.bf16.msra.mxu0 0
        %853 = vmatprep.subr.bf16.mxu0 0
        %854 = vmatpush1.bf16.msra.mxu0 0
        %855 = vmatprep.subr.bf16.mxu0 0
        %856 = vmatpush1.bf16.msra.mxu0 0
        %857 = vmatprep.subr.bf16.mxu0 0
        %858 = vmatpush1.bf16.msra.mxu0 0
        %859 = vmatprep.mubr.bf16.mxu0 0
        %860 = vmatmul.mubr.bf16.gmra.mrb[0].mxu0 %v415
        %v861 = vpop.f32.mrb[0].mxu0
        %v862 = vadd.f32 0.0, %v861
        %v863 = vpop.f32.mrb[0].mxu0
        %v864 = vpop.f32.mrb[0].mxu0
        %v865 = vpop.f32.mrb[0].mxu0
        %866 = vdwg.mxu0
        %v867 = vld [vmem:[#allocation2] sm:$0xff]
        %v876 = vrot.slane %v514, 7
        %vm877 = vcmask 1041409
        %v878 = vsel %vm877, %v876, %v456
        %v879 = vrot.slane %v572, 6
        %vm880 = vcmask 1042434
        %v881 = vsel %vm880, %v879, %v878
        %v882 = vrot.slane %v630, 5
        %vm883 = vcmask 1043459
        %v884 = vsel %vm883, %v882, %v881
        %v885 = vrot.slane %v688, 4
        %vm886 = vcmask 1044484
        %v887 = vsel %vm886, %v885, %v884
        %v888 = vrot.slane %v746, 3
        %vm889 = vcmask 1045509
        %v890 = vsel %vm889, %v888, %v887
        %v891 = vrot.slane %v804, 2
        %vm892 = vcmask 1046534
        %v893 = vsel %vm892, %v891, %v890
        %v894 = vrot.slane %v862, 1
        %vm895 = vcmask 1047559
        %v896 = vsel %vm895, %v894, %v893
        %v898 = vadd.f32 %v867, %v896
        %vm899 = vcmask 261120
        %900 = vst.msk [vmem:[#allocation2] sm:$0xff] %vm899, %v898
        // Predicated region
        $region53: #{tpu_custom_call.1} parent=47 // pred_check
          %p901 = pneg %p352
        $region54: #{tpu_custom_call.1} parent=47 // pred_check_branch
          %903 = sbr.rel (%p901) target = $region56
        $region55: #{tpu_custom_call.1} parent=47 // pred_region
          %v904 = vld [vmem:[#allocation2] sm:$0xff]
          %v905 = vmul.f32 %v904, 0.025
          %v906 = vld [vmem:[%s1] sm:$0xff]
          %v907 = vld [vmem:[%s1 + $0x8] sm:$0xff]
          %v908 = vld [vmem:[%s1 + $0x10] sm:$0xff]
          %v909 = vld [vmem:[%s1 + $0x18] sm:$0xff]
          %v910 = vld [vmem:[%s2] sm:$0x1]
          %v912 = vlaneseq
          %v913 = vshrl.u32 %v912, 7
          %v914 = vsub.s32 0, %v913
          %v915 = vrot.slane %v910, %v914
          %v918 = vsel %vm899, %v905, 0
          %920 = vmatprep.subr.mxu0 0.0
          %921 = vmatpush1.msra.mxu0 %v906
          %922 = vmatprep.subr.mxu0 0.0
          %923 = vmatpush1.msra.mxu0 %v907
          %924 = vmatprep.subr.mxu0 0.0
          %925 = vmatpush1.msra.mxu0 %v908
          %926 = vmatprep.subr.mxu0 0.0
          %927 = vmatpush1.msra.mxu0 %v909
          %928 = vmatprep.subr.mxu0 0.0
          %929 = vmatpush1.msra.mxu0 0.0
          %930 = vmatprep.subr.mxu0 0.0
          %931 = vmatpush1.msra.mxu0 0.0
          %932 = vmatprep.subr.mxu0 0.0
          %933 = vmatpush1.msra.mxu0 0.0
          %934 = vmatprep.subr.mxu0 0.0
          %935 = vmatpush1.msra.mxu0 0.0
          %936 = vmatprep.subr.mxu0 0.0
          %937 = vmatpush1.msra.mxu0 0.0
          %938 = vmatprep.subr.mxu0 0.0
          %939 = vmatpush1.msra.mxu0 0.0
          %940 = vmatprep.subr.mxu0 0.0
          %941 = vmatpush1.msra.mxu0 0.0
          %942 = vmatprep.subr.mxu0 0.0
          %943 = vmatpush1.msra.mxu0 0.0
          %944 = vmatprep.subr.mxu0 0.0
          %945 = vmatpush1.msra.mxu0 0.0
          %946 = vmatprep.subr.mxu0 0.0
          %947 = vmatpush1.msra.mxu0 0.0
          %948 = vmatprep.subr.mxu0 0.0
          %949 = vmatpush1.msra.mxu0 0.0
          %950 = vmatprep.subr.mxu0 0.0
          %951 = vmatpush1.msra.mxu0 0.0
          %952 = vmatprep.subr.mxu0 0.0
          %953 = vmatpush1.msra.mxu0 0.0
          %954 = vmatprep.subr.mxu0 0.0
          %955 = vmatpush1.msra.mxu0 0.0
          %956 = vmatprep.subr.mxu0 0.0
          %957 = vmatpush1.msra.mxu0 0.0
          %958 = vmatprep.subr.mxu0 0.0
          %959 = vmatpush1.msra.mxu0 0.0
          %960 = vmatprep.subr.mxu0 0.0
          %961 = vmatpush1.msra.mxu0 0.0
          %962 = vmatprep.subr.mxu0 0.0
          %963 = vmatpush1.msra.mxu0 0.0
          %964 = vmatprep.subr.mxu0 0.0
          %965 = vmatpush1.msra.mxu0 0.0
          %966 = vmatprep.subr.mxu0 0.0
          %967 = vmatpush1.msra.mxu0 0.0
          %968 = vmatprep.subr.mxu0 0.0
          %969 = vmatpush1.msra.mxu0 0.0
          %970 = vmatprep.subr.mxu0 0.0
          %971 = vmatpush1.msra.mxu0 0.0
          %972 = vmatprep.subr.mxu0 0.0
          %973 = vmatpush1.msra.mxu0 0.0
          %974 = vmatprep.subr.mxu0 0.0
          %975 = vmatpush1.msra.mxu0 0.0
          %976 = vmatprep.subr.mxu0 0.0
          %977 = vmatpush1.msra.mxu0 0.0
          %978 = vmatprep.subr.mxu0 0.0
          %979 = vmatpush1.msra.mxu0 0.0
          %980 = vmatprep.subr.mxu0 0.0
          %981 = vmatpush1.msra.mxu0 0.0
          %982 = vmatprep.subr.mxu0 0.0
          %983 = vmatpush1.msra.mxu0 0.0
          %984 = vmatprep.mubr.f32.mxu0 0.0
          %985 = vmatmul.mubr.f32.gmra.mrb[0].mxu0 %v918
          %v986 = vpop.f32.mrb[0].mxu0
          %v987 = vadd.f32 %v915, %v986
          %v988 = vpop.f32.mrb[0].mxu0
          %989 = vdwg.mxu0
          %v990 = vld [vmem:[%s3] sm:$0xff]
          %v991 = vld [vmem:[%s3 + $0x8] sm:$0xff]
          %v992 = vld [vmem:[%s3 + $0x10] sm:$0xff]
          %v993 = vld [vmem:[%s3 + $0x18] sm:$0xff]
          %v994 = vld [vmem:[%s4] sm:$0x1]
          %v996 = vlaneseq
          %v997 = vshrl.u32 %v996, 7
          %v998 = vsub.s32 0, %v997
          %v999 = vrot.slane %v994, %v998
          %1001 = vmatprep.subr.mxu0 0.0
          %1002 = vmatpush1.msra.mxu0 %v990
          %1003 = vmatprep.subr.mxu0 0.0
          %1004 = vmatpush1.msra.mxu0 %v991
          %1005 = vmatprep.subr.mxu0 0.0
          %1006 = vmatpush1.msra.mxu0 %v992
          %1007 = vmatprep.subr.mxu0 0.0
          %1008 = vmatpush1.msra.mxu0 %v993
          %1009 = vmatprep.subr.mxu0 0.0
          %1010 = vmatpush1.msra.mxu0 0.0
          %1011 = vmatprep.subr.mxu0 0.0
          %1012 = vmatpush1.msra.mxu0 0.0
          %1013 = vmatprep.subr.mxu0 0.0
          %1014 = vmatpush1.msra.mxu0 0.0
          %1015 = vmatprep.subr.mxu0 0.0
          %1016 = vmatpush1.msra.mxu0 0.0
          %1017 = vmatprep.subr.mxu0 0.0
          %1018 = vmatpush1.msra.mxu0 0.0
          %1019 = vmatprep.subr.mxu0 0.0
          %1020 = vmatpush1.msra.mxu0 0.0
          %1021 = vmatprep.subr.mxu0 0.0
          %1022 = vmatpush1.msra.mxu0 0.0
          %1023 = vmatprep.subr.mxu0 0.0
          %1024 = vmatpush1.msra.mxu0 0.0
          %1025 = vmatprep.subr.mxu0 0.0
          %1026 = vmatpush1.msra.mxu0 0.0
          %1027 = vmatprep.subr.mxu0 0.0
          %1028 = vmatpush1.msra.mxu0 0.0
          %1029 = vmatprep.subr.mxu0 0.0
          %1030 = vmatpush1.msra.mxu0 0.0
          %1031 = vmatprep.subr.mxu0 0.0
          %1032 = vmatpush1.msra.mxu0 0.0
          %1033 = vmatprep.subr.mxu0 0.0
          %1034 = vmatpush1.msra.mxu0 0.0
          %1035 = vmatprep.subr.mxu0 0.0
          %1036 = vmatpush1.msra.mxu0 0.0
          %1037 = vmatprep.subr.mxu0 0.0
          %1038 = vmatpush1.msra.mxu0 0.0
          %1039 = vmatprep.subr.mxu0 0.0
          %1040 = vmatpush1.msra.mxu0 0.0
          %1041 = vmatprep.subr.mxu0 0.0
          %1042 = vmatpush1.msra.mxu0 0.0
          %1043 = vmatprep.subr.mxu0 0.0
          %1044 = vmatpush1.msra.mxu0 0.0
          %1045 = vmatprep.subr.mxu0 0.0
          %1046 = vmatpush1.msra.mxu0 0.0
          %1047 = vmatprep.subr.mxu0 0.0
          %1048 = vmatpush1.msra.mxu0 0.0
          %1049 = vmatprep.subr.mxu0 0.0
          %1050 = vmatpush1.msra.mxu0 0.0
          %1051 = vmatprep.subr.mxu0 0.0
          %1052 = vmatpush1.msra.mxu0 0.0
          %1053 = vmatprep.subr.mxu0 0.0
          %1054 = vmatpush1.msra.mxu0 0.0
          %1055 = vmatprep.subr.mxu0 0.0
          %1056 = vmatpush1.msra.mxu0 0.0
          %1057 = vmatprep.subr.mxu0 0.0
          %1058 = vmatpush1.msra.mxu0 0.0
          %1059 = vmatprep.subr.mxu0 0.0
          %1060 = vmatpush1.msra.mxu0 0.0
          %1061 = vmatprep.subr.mxu0 0.0
          %1062 = vmatpush1.msra.mxu0 0.0
          %1063 = vmatprep.subr.mxu0 0.0
          %1064 = vmatpush1.msra.mxu0 0.0
          %1065 = vmatprep.mubr.f32.mxu0 0.0
          %1066 = vmatmul.mubr.f32.gmra.mrb[0].mxu0 %v918
          %v1067 = vpop.f32.mrb[0].mxu0
          %v1068 = vadd.f32 %v999, %v1067
          %v1069 = vpop.f32.mrb[0].mxu0
          %1070 = vdwg.mxu0
          %v1071 = vmax.f32 %v1068, 0.0
          %v1072 = vld [vmem:[%s5] sm:$0x1]
          %v1074 = vlaneseq
          %v1075 = vshrl.u32 %v1074, 7
          %v1076 = vsub.s32 0, %v1075
          %v1077 = vrot.slane %v1072, %v1076
          %v1079 = vmul.f32 %v1071, %v1077
          %v1080 = vsel %vm899, %v1079, 0.0
          %1081 = vadd.xlane.f32.xlu0 %v1080
          %v1082 = vpop.xlane.xlu0 %1081
          %v1083 = vld [vmem:[#allocation3] sm:$0x1]
          %v1085 = vlaneseq
          %v1086 = vshrl.u32 %v1085, 7
          %v1087 = vsub.s32 0, %v1086
          %v1088 = vrot.slane %v1083, %v1087
          %v1090 = vadd.f32 %v1082, %v1088
          %vm1091 = vcmask 80896
          %1092 = vst.msk [vmem:[%s327] sm:$0xff] %vm1091, %v987
          %v1093 = vxor.u32 %v1090, 2147483648
          %v1094 = vmul.f32 %v1093, 1.442695
          %v1095 = vpow.pop %v1094
          %v1096 = vadd.f32 %v1095, 1.0
          %v1097 = vrcp.pop %v1096
          %v1098 = vmul.f32 1.0, %v1097
          %vm1099 = vcmask 7168
          %1100 = vst.msk [vmem:[%s349] sm:$0xff] %vm1099, %v1098
        $region56: #{tpu_custom_call.1} parent=47 // pred_fallthru
          _
        %s1101 = sand.u32 %s199, 1
        %s1102 = scalar_lea.sflag [#allocation5], %s1101
        %s1103 = sand.u32 %s199, 1
        %s1104 = smul.addr %s1103, 8
        %s1105 = scalar_lea.vmem [#allocation4], %s1104
        %p1106 = scmp.lt.s32.totalorder %s29, 1
        %s1107 = scalar_select %p1106, %s29, 1
        %s1108 = smul.addr %s1107, 8
        %s1109 = scalar_lea.vmem %s8, %s1108
        // Predicated region
        $region57: #{tpu_custom_call.1} parent=47 // pred_check
          %p1110 = pneg %p209
        $region58: #{tpu_custom_call.1} parent=47 // pred_check_branch
          %1112 = sbr.rel (%p1110) target = $region60
        $region59: #{tpu_custom_call.1} parent=47 // pred_region
          %s1114 = ssub.s32 128, 128
          %1115 = vsyncadd %s1102, %s1114
          %s1116 = smul.addr %s29, 128
          %s1117 = scalar_lea.hbm %s7, %s1116
          %s1119 = sshll.u32 %s1105, 4
          %s1120 = int_to_ptr.vmem [resolvable:$true] %s1119
          %1122 = dma.vmem_to_hbm [thread:$0]  %s1120, 128, %s1117, %s1102
        $region60: #{tpu_custom_call.1} parent=47 // pred_fallthru
          _
        // Predicated region
        $region61: #{tpu_custom_call.1} parent=47 // pred_check
          %p1123 = pneg %p235
        $region62: #{tpu_custom_call.1} parent=47 // pred_check_branch
          %1125 = sbr.rel (%p1123) target = $region64
        $region63: #{tpu_custom_call.1} parent=47 // pred_region
          _
        $region64: #{tpu_custom_call.1} parent=47 // pred_fallthru
          _
      $region48: #{tpu_custom_call.1} parent=5 // pred_fallthru
        _
      %p1126 = scmp.le.s32.totalorder 2, %s20
      // Predicated region
      $region65: #{tpu_custom_call.1} parent=5 // pred_check
        %p1127 = pneg %p1126
      $region66: #{tpu_custom_call.1} parent=5 // pred_check_branch
        %1129 = sbr.rel (%p1127) target = $region68
      $region67: #{tpu_custom_call.1} parent=5 // pred_region
        %s1130 = ssub.s32 %s20, 2
        // Predicated region
        $region69: #{tpu_custom_call.1} parent=67 // pred_check
          %p1131 = pneg %p215
        $region70: #{tpu_custom_call.1} parent=67 // pred_check_branch
          %1133 = sbr.rel (%p1131) target = $region72
        $region71: #{tpu_custom_call.1} parent=67 // pred_region
          %s1134 = sand.u32 %s200, 1
          %s1135 = scalar_lea.sflag [#allocation5], %s1134
          %s1136 = sand.u32 %s200, 1
          %s1137 = smul.addr %s1136, 8
          %s1138 = scalar_lea.vmem [#allocation4], %s1137
          %1139 = dma.done %s1135, 128
        $region72: #{tpu_custom_call.1} parent=67 // pred_fallthru
          _
        // Predicated region
        $region73: #{tpu_custom_call.1} parent=67 // pred_check
          %p1140 = pneg %p241
        $region74: #{tpu_custom_call.1} parent=67 // pred_check_branch
          %1142 = sbr.rel (%p1140) target = $region76
        $region75: #{tpu_custom_call.1} parent=67 // pred_region
          %p1143 = scmp.lt.s32.totalorder %s31, 1
          %s1144 = scalar_select %p1143, %s31, 1
          %s1145 = smul.addr %s1144, 8
          %s1146 = scalar_lea.vmem %s8, %s1145
        $region76: #{tpu_custom_call.1} parent=67 // pred_fallthru
          _
      $region68: #{tpu_custom_call.1} parent=5 // pred_fallthru
        _
    $region6: #{tpu_custom_call.1} parent=1 // loop_footer
      %s24 = sadd.s32 1, %s20
    $region7: #{tpu_custom_call.1} parent=1 // loop_footer_branch
      %19 = sbr.rel target = $region3
    $region8: #{tpu_custom_call.1} parent=1 // loop_exit
      _
    %1147 = vsyncpa [#allocation5], 1
    %s1148 = scalar_lea.sflag [#allocation5], 1
    %1149 = vsyncpa %s1148, 1

</llo_original>
